<compile_context>
chip_gen: v7x
topology: tpu7x:2x2x1
jax: 0.10.0
libtpu: 0.0.40
codegen_flags: <defaults>
</compile_context>

<pallas_src>
import jax
import jax.numpy as jnp
from jax.experimental import pallas as pl
from jax.experimental.pallas import tpu as pltpu

EPS = 1e-8
LANES = 128          # lane-dense minor dim of the working layout
MAX_ROWS_PER_BLOCK = 512   # 512*128*4B = 256 KiB per input tile


def _clp_kernel(re_ref, im_ref, out_ref):
    re = re_ref[...]
    im = im_ref[...]
    # magnitude: sqrt(re^2 + im^2 + eps)  (mul/add on VPU, sqrt on EUP)
    out_ref[...] = jnp.sqrt(re * re + im * im + EPS)


def _rows_per_block(total_rows):
    # Multiple of 8 (sublane constraint), capped so small inputs don't force
    # pointless padding and large inputs get a ~256 KiB/input tile.
    rows = ((total_rows + 7) // 8) * 8
    return max(8, min(MAX_ROWS_PER_BLOCK, rows))


def complex_linear_projection(real, imag):
    """real, imag: [B, C, F, T] -> sqrt(real^2 + imag^2 + 1e-8), same shape."""
    assert real.shape == imag.shape
    orig_shape = real.shape
    dtype = real.dtype
    total = real.size

    total_rows = pl.cdiv(total, LANES)
    rows_blk = _rows_per_block(total_rows)
    padded_rows = pl.cdiv(total_rows, rows_blk) * rows_blk
    padded = padded_rows * LANES

    # Flatten to a lane-dense [rows, 128] slab (pad tail; sliced off below).
    re2d = jnp.pad(real.reshape(-1), (0, padded - total)).reshape(padded_rows,
                                                                  LANES)
    im2d = jnp.pad(imag.reshape(-1), (0, padded - total)).reshape(padded_rows,
                                                                  LANES)

    grid = (padded_rows // rows_blk,)
    block = pl.BlockSpec((rows_blk, LANES), lambda b: (b, 0))

    out2d = pl.pallas_call(
        _clp_kernel,
        out_shape=jax.ShapeDtypeStruct((padded_rows, LANES), dtype),
        grid=grid,
        in_specs=[block, block],
        out_specs=block,
        compiler_params=pltpu.CompilerParams(
            dimension_semantics=("parallel",)),
    )(re2d, im2d)

    return out2d.reshape(-1)[:total].reshape(orig_shape)


def ref_forward(real, imag):
    # Pure-JAX reference (mirrors the torch module exactly).
    return jnp.sqrt(real ** 2 + imag ** 2 + EPS)


if __name__ == "__main__":
    key = jax.random.PRNGKey(0)
    k_re, k_im = jax.random.split(key)
    B, C, F, T = 2, 4, 16, 16
    real = jax.random.normal(k_re, (B, C, F, T), dtype=jnp.float32)
    imag = jax.random.normal(k_im, (B, C, F, T), dtype=jnp.float32)

    out = complex_linear_projection(real, imag)
    out = jax.block_until_ready(out)

    ref = ref_forward(real, imag)
    assert out.shape == (B, C, F, T), out.shape
    assert jnp.allclose(out, ref, rtol=1e-5, atol=1e-6), (
        float(jnp.max(jnp.abs(out - ref))))
    print("KERNEL_OK")
</pallas_src>

<mosaic_0001>
module attributes {stable_mosaic.version = 11 : i64} {
  func.func @_clp_kernel(%arg0: i32, %arg1: memref<16x128xf32, #tpu.memory_space<vmem>>, %arg2: memref<16x128xf32, #tpu.memory_space<vmem>>, %arg3: memref<16x128xf32, #tpu.memory_space<vmem>>) attributes {dimension_semantics = [#tpu.dimension_semantics<parallel>], iteration_bounds = array<i64: 1>, scalar_prefetch = 0 : i64, scratch_operands = 0 : i64, tpu.core_type = #tpu.core_type<tc>, window_params = [{transform_indices = @transform_0, window_bounds = array<i64: 16, 128>}, {transform_indices = @transform_1, window_bounds = array<i64: 16, 128>}, {transform_indices = @transform_2, window_bounds = array<i64: 16, 128>}]} {
    %c0 = arith.constant 0 : index
    %c0_0 = arith.constant 0 : index
    %0 = vector.load %arg1[%c0, %c0_0] : memref<16x128xf32, #tpu.memory_space<vmem>>, vector<16x128xf32>
    %c0_1 = arith.constant 0 : index
    %c0_2 = arith.constant 0 : index
    %1 = vector.load %arg2[%c0_1, %c0_2] : memref<16x128xf32, #tpu.memory_space<vmem>>, vector<16x128xf32>
    %2 = arith.mulf %0, %0 : vector<16x128xf32>
    %3 = arith.mulf %1, %1 : vector<16x128xf32>
    %4 = arith.addf %2, %3 : vector<16x128xf32>
    %cst = arith.constant 9.99999993E-9 : f32
    %5 = vector.broadcast %cst : f32 to vector<16x128xf32>
    %6 = arith.addf %4, %5 : vector<16x128xf32>
    %7 = math.sqrt %6 : vector<16x128xf32>
    %c0_3 = arith.constant 0 : index
    %c0_4 = arith.constant 0 : index
    %8 = vector.load %arg3[%c0_3, %c0_4] : memref<16x128xf32, #tpu.memory_space<vmem>>, vector<16x128xf32>
    tpu.vector_store %arg3[%c0_3, %c0_4], %7 {strides = array<i32>} : memref<16x128xf32, #tpu.memory_space<vmem>>, vector<16x128xf32>,
    return
  }
  func.func @transform_0(%arg0: i32) -> (i32, i32) {
    %c0_i32 = arith.constant 0 : i32
    %c0_i32_0 = arith.constant 0 : i32
    return %arg0, %c0_i32 : i32, i32
  }
  func.func @transform_1(%arg0: i32) -> (i32, i32) {
    %c0_i32 = arith.constant 0 : i32
    %c0_i32_0 = arith.constant 0 : i32
    return %arg0, %c0_i32 : i32, i32
  }
  func.func @transform_2(%arg0: i32) -> (i32, i32) {
    %c0_i32 = arith.constant 0 : i32
    %c0_i32_0 = arith.constant 0 : i32
    return %arg0, %c0_i32 : i32, i32
  }
}

</mosaic_0001>

<llo_original>
// kernel: tpu_custom_call.1
$region0: #{tpu_custom_call.1}
  #allocation0 [shape = 'u32[]', space=smem, size = 0x4, offset = 0x4, fixed_abs, tag = 'smem constant byte address 0x4 - core index']
  #allocation1 [shape = 'u32[144,128]{1,0:T(1,128)}', space=vmem, size = 0x12000, scoped, tag = 'internal scratch']
  %s0 = inlined_call_operand.hbm [shape: f32[16,128], index: 0, kind: input, shape index: {}]
  %s1 = inlined_call_operand.hbm [shape: f32[16,128], index: 1, kind: input, shape index: {}]
  %s2 = inlined_call_operand.hbm [shape: f32[16,128], index: 2, kind: output, shape index: {}]
  %s3 = sld [smem:[#allocation0]]
  $region26: #{tpu_custom_call.1} parent=0
    _
  %s5 = ssub.s32 1, %s3
  %s6 = scalar_select 0, %s5, %s3
  $region1: #{tpu_custom_call.1} parent=0
    #allocation2 [shape = 'u8[8192]{0}', space=vmem, size = 0x2000, scoped, tag = 'input window, operand 0, single buffered']
    #allocation3 [shape = 's32[1]{0}', space=sflag, size = 0x4, scoped, tag = 'scoped memory for tpu_custom_call.1']
    #allocation4 [shape = 's32[1]{0}', space=sflag, size = 0x4, scoped, tag = 'scoped memory for tpu_custom_call.1']
    #allocation5 [shape = 'u8[8192]{0}', space=vmem, size = 0x2000, scoped, tag = 'input window, operand 1, single buffered']
    #allocation6 [shape = 's32[1]{0}', space=sflag, size = 0x4, scoped, tag = 'scoped memory for tpu_custom_call.1']
    #allocation7 [shape = 'u8[8192]{0}', space=vmem, size = 0x2000, scoped, tag = 'output window, operand 0, single buffered']
    %7 = vsyncpa [#allocation3], 0
    %8 = vsyncpa [#allocation6], 0
    %9 = vsyncpa [#allocation4], 0
    // Predicated region
    $region2: #{tpu_custom_call.1} parent=1 // pred_check
      _
    $region3: #{tpu_custom_call.1} parent=1 // pred_check_branch
      %11 = sbr.rel (0) target = $region5
    $region4: #{tpu_custom_call.1} parent=1 // pred_region
      %s13 = ssub.s32 256, 256
      %14 = vsyncadd [#allocation3], %s13
      %s15 = sshll.u32 [#allocation2], 4
      %s16 = int_to_ptr.vmem [resolvable:$true] %s15
      %21 = dma.hbm_to_vmem [thread:$0]  %s0, 256, %s16, [#allocation3], 128, 128, 8
    $region5: #{tpu_custom_call.1} parent=1 // pred_fallthru
      _
    // Predicated region
    $region6: #{tpu_custom_call.1} parent=1 // pred_check
      _
    $region7: #{tpu_custom_call.1} parent=1 // pred_check_branch
      %23 = sbr.rel (0) target = $region9
    $region8: #{tpu_custom_call.1} parent=1 // pred_region
      %s25 = ssub.s32 256, 256
      %26 = vsyncadd [#allocation6], %s25
      %s27 = sshll.u32 [#allocation5], 4
      %s28 = int_to_ptr.vmem [resolvable:$true] %s27
      %33 = dma.hbm_to_vmem [thread:$0]  %s1, 256, %s28, [#allocation6], 128, 128, 8
    $region9: #{tpu_custom_call.1} parent=1 // pred_fallthru
      _
    // Predicated region
    $region10: #{tpu_custom_call.1} parent=1 // pred_check
      _
    $region11: #{tpu_custom_call.1} parent=1 // pred_check_branch
      %35 = sbr.rel (0) target = $region13
    $region12: #{tpu_custom_call.1} parent=1 // pred_region
      %36 = dma.done [#allocation3], 256
    $region13: #{tpu_custom_call.1} parent=1 // pred_fallthru
      _
    // Predicated region
    $region14: #{tpu_custom_call.1} parent=1 // pred_check
      _
    $region15: #{tpu_custom_call.1} parent=1 // pred_check_branch
      %38 = sbr.rel (0) target = $region17
    $region16: #{tpu_custom_call.1} parent=1 // pred_region
      %39 = dma.done [#allocation6], 256
    $region17: #{tpu_custom_call.1} parent=1 // pred_fallthru
      _
    %v40 = vld [vmem:[#allocation2] sm:$0xff]
    %v41 = vld [vmem:[#allocation2 + $0x8] sm:$0xff]
    %v42 = vld [vmem:[#allocation5] sm:$0xff]
    %v43 = vld [vmem:[#allocation5 + $0x8] sm:$0xff]
    %v44 = vmul.f32 %v40, %v40
    %v45 = vmul.f32 %v41, %v41
    %v46 = vmul.f32 %v42, %v42
    %v47 = vmul.f32 %v43, %v43
    %v48 = vadd.f32 %v44, %v46
    %v49 = vadd.f32 %v45, %v47
    %v50 = vadd.f32 %v48, 1e-08
    %v51 = vadd.f32 %v49, 1e-08
    %v52 = vrsqrt.pop %v50
    %v53 = vmul.f32 %v50, %v52
    %vm54 = vcmp.eq.f32.partialorder %v50, inf
    %v55 = vsel %vm54, %v50, %v53
    %vm56 = vcmp.eq.f32.partialorder %v50, 0.0
    %v57 = vand.u32 %v50, 2147483648
    %v58 = vsel %vm56, %v57, %v55
    %v59 = vrsqrt.pop %v51
    %v60 = vmul.f32 %v51, %v59
    %vm61 = vcmp.eq.f32.partialorder %v51, inf
    %v62 = vsel %vm61, %v51, %v60
    %vm63 = vcmp.eq.f32.partialorder %v51, 0.0
    %v64 = vand.u32 %v51, 2147483648
    %v65 = vsel %vm63, %v64, %v62
    %66 = vst [vmem:[#allocation7] sm:$0xff] %v58
    %67 = vst [vmem:[#allocation7 + $0x8] sm:$0xff] %v65
    // Predicated region
    $region18: #{tpu_custom_call.1} parent=1 // pred_check
      _
    $region19: #{tpu_custom_call.1} parent=1 // pred_check_branch
      %69 = sbr.rel (0) target = $region21
    $region20: #{tpu_custom_call.1} parent=1 // pred_region
      %s71 = ssub.s32 256, 256
      %72 = vsyncadd [#allocation4], %s71
      %s73 = sshll.u32 [#allocation7], 4
      %s74 = int_to_ptr.vmem [resolvable:$true] %s73
      %79 = dma.vmem_to_hbm [thread:$0]  %s74, 256, %s2, [#allocation4], 128, 128, 8
    $region21: #{tpu_custom_call.1} parent=1 // pred_fallthru
      _
    // Predicated region
    $region22: #{tpu_custom_call.1} parent=1 // pred_check
      _
    $region23: #{tpu_custom_call.1} parent=1 // pred_check_branch
      %81 = sbr.rel (0) target = $region25
    $region24: #{tpu_custom_call.1} parent=1 // pred_region
      %82 = dma.done [#allocation4], 256
    $region25: #{tpu_custom_call.1} parent=1 // pred_fallthru
      _
    %83 = vsyncpa [#allocation3], 1
    %84 = vsyncpa [#allocation6], 1
    %85 = vsyncpa [#allocation4], 1

</llo_original>
